<compile_context>
chip_gen: v7x
topology: tpu7x:2x2x1
jax: 0.10.0
libtpu: 0.0.40
codegen_flags: <defaults>
</compile_context>

<pallas_src>
import functools

import jax
import jax.numpy as jnp
from jax.experimental import pallas as pl
from jax.experimental.pallas import tpu as pltpu

_H = 128          # hidden width
_IN = 4           # observation width
_OUT = 2          # actions


def _cdiv(a, b):
    return -(-a // b)


def _round_up(n, m):
    return _cdiv(n, m) * m


def _select_tiling(batch, tile_b):
    """Pick (tile, grid_steps, padded_batch) with lane-aligned tiles."""
    tile_b = max(128, _round_up(tile_b, 128))
    b128 = _round_up(max(batch, 1), 128)          # pad only to the lane width
    steps = _cdiv(b128, tile_b)
    # Keep >=2 parallel steps for big batches so v7x's 2nd TensorCore works;
    # small batches stay single-step (one grid-step overhead total).
    if steps == 1 and b128 >= 4096:
        steps = 2
    tb = _round_up(_cdiv(b128, steps), 128)
    return tb, steps, steps * tb


def policy_kernel(xt_ref, w1_ref, b1_ref, w2_ref, b2_ref, out_ref):
    # xt_ref : (4, TB)    lane-dense input tile
    # w1_ref : (128, 4)   fc1 weight (PyTorch layout), VMEM-resident
    # b1_ref : (128, 1)
    # w2_ref : (8, 128)   fc2 weight padded to 8 sublanes (rows 0/1 real)
    # b2_ref : (8, 1)
    # out_ref: (2, TB)    lane-dense output tile
    x = xt_ref[...]

    # fc1 + ReLU on the MXU: (128,4) @ (4,TB) -> (128,TB), f32 accumulate.
    h = jnp.dot(w1_ref[...], x, preferred_element_type=jnp.float32)
    h = jnp.maximum(h + b1_ref[...], 0.0)

    # fc2 on the MXU: (8,128) @ (128,TB) -> (8,TB); only rows 0/1 are real.
    s = jnp.dot(w2_ref[...], h, preferred_element_type=jnp.float32) + b2_ref[...]

    # Exact 2-class softmax: p(action=1) = sigmoid(s1 - s0).
    p1 = jax.nn.sigmoid(s[1:2, :] - s[0:1, :])            # (1, TB), EUP
    out_ref[...] = jnp.concatenate([1.0 - p1, p1], axis=0)  # one dense store


@functools.partial(jax.jit, static_argnames=("tile_b",))
def policy_forward(x, w1, b1, w2, b2, *, tile_b=16384):
    """Forward pass of Policy: softmax(relu(x @ w1.T + b1) @ w2.T + b2)."""
    assert x.ndim == 2 and x.shape[1] == _IN, x.shape
    assert w1.shape == (_H, _IN) and b1.shape == (_H,), (w1.shape, b1.shape)
    assert w2.shape == (_OUT, _H) and b2.shape == (_OUT,), (w2.shape, b2.shape)

    B = x.shape[0]
    tb, steps, b_pad = _select_tiling(B, tile_b)

    x_t = x.astype(jnp.float32).T                           # (4, B) lane-dense
    if b_pad != B:
        x_t = jnp.pad(x_t, ((0, 0), (0, b_pad - B)))

    b1c = b1.astype(jnp.float32).reshape(_H, 1)
    # Pad fc2 to 8 sublanes so the second matmul is sublane-aligned.
    w2p = jnp.zeros((8, _H), jnp.float32).at[:_OUT].set(w2.astype(jnp.float32))
    b2p = jnp.zeros((8, 1), jnp.float32).at[:_OUT, 0].set(b2.astype(jnp.float32))

    cost = pl.CostEstimate(
        flops=2 * b_pad * _IN * _H + 2 * b_pad * 8 * _H + 4 * b_pad,
        transcendentals=b_pad,
        bytes_accessed=4 * (b_pad * _IN + b_pad * _OUT + _H * _IN + _H + 8 * _H + 8),
    )

    out_t = pl.pallas_call(
        policy_kernel,
        out_shape=jax.ShapeDtypeStruct((_OUT, b_pad), jnp.float32),
        grid=(steps,),
        in_specs=[
            pl.BlockSpec((_IN, tb), lambda i: (0, i)),      # x tiles, pipelined
            pl.BlockSpec((_H, _IN), lambda i: (0, 0)),      # weights stay resident
            pl.BlockSpec((_H, 1), lambda i: (0, 0)),
            pl.BlockSpec((8, _H), lambda i: (0, 0)),
            pl.BlockSpec((8, 1), lambda i: (0, 0)),
        ],
        out_specs=pl.BlockSpec((_OUT, tb), lambda i: (0, i)),
        compiler_params=pltpu.CompilerParams(
            dimension_semantics=("parallel",),
            # ~0.6 KB/row/step; 32 MiB is >= every generation's default scoped
            # limit and <= v7x's 64 MiB physical VMEM.
            vmem_limit_bytes=32 * 1024 * 1024,
        ),
        cost_estimate=cost,
    )(x_t, w1.astype(jnp.float32), b1c, w2p, b2p)

    out = out_t.T                                           # (b_pad, 2)
    return out[:B] if b_pad != B else out


def init_params(key):
    # PyTorch nn.Linear default init: U(-1/sqrt(fan_in), +1/sqrt(fan_in)),
    # weights in PyTorch-native (out_features, in_features) layout.
    k1, k2, k3, k4 = jax.random.split(key, 4)
    bound1 = 1.0 / jnp.sqrt(float(_IN))
    bound2 = 1.0 / jnp.sqrt(float(_H))
    w1 = jax.random.uniform(k1, (_H, _IN), jnp.float32, -bound1, bound1)
    b1 = jax.random.uniform(k2, (_H,), jnp.float32, -bound1, bound1)
    w2 = jax.random.uniform(k3, (_OUT, _H), jnp.float32, -bound2, bound2)
    b2 = jax.random.uniform(k4, (_OUT,), jnp.float32, -bound2, bound2)
    return w1, b1, w2, b2


# TODO(synk): Policy.saved_log_probs / Policy.rewards are training-time Python
# bookkeeping lists, not part of the forward pass; intentionally not modeled.

if __name__ == "__main__":
    key = jax.random.PRNGKey(0)
    kx, kp = jax.random.split(key)
    w1, b1, w2, b2 = init_params(kp)

    def reference(x):
        h = jnp.maximum(x @ w1.T + b1, 0.0)
        return jax.nn.softmax(h @ w2.T + b2, axis=1)

    # Small-batch RL path: single grid step, lane-padded to 128 columns.
    x8 = jax.random.normal(kx, (8, _IN), jnp.float32)
    out8 = jax.block_until_ready(policy_forward(x8, w1, b1, w2, b2))
    assert out8.shape == (8, _OUT)
    assert jnp.allclose(out8, reference(x8), atol=1e-5, rtol=1e-5)
    assert jnp.allclose(jnp.sum(out8, axis=1), 1.0, atol=1e-5)

    # Multi-step grid + padding path (2 steps of 256 columns for B=300).
    x300 = jax.random.normal(jax.random.fold_in(kx, 1), (300, _IN), jnp.float32)
    out300 = jax.block_until_ready(policy_forward(x300, w1, b1, w2, b2, tile_b=256))
    assert out300.shape == (300, _OUT)
    assert jnp.allclose(out300, reference(x300), atol=1e-5, rtol=1e-5)
    assert jnp.allclose(jnp.sum(out300, axis=1), 1.0, atol=1e-5)

    print("KERNEL_OK")
</pallas_src>

<mosaic_0001>
module attributes {stable_mosaic.version = 11 : i64} {
  func.func @policy_kernel(%arg0: i32, %arg1: memref<4x128xf32, #tpu.memory_space<vmem>>, %arg2: memref<128x4xf32, #tpu.memory_space<vmem>>, %arg3: memref<128x1xf32, #tpu.memory_space<vmem>>, %arg4: memref<8x128xf32, #tpu.memory_space<vmem>>, %arg5: memref<8x1xf32, #tpu.memory_space<vmem>>, %arg6: memref<2x128xf32, #tpu.memory_space<vmem>>) attributes {dimension_semantics = [#tpu.dimension_semantics<parallel>], iteration_bounds = array<i64: 1>, scalar_prefetch = 0 : i64, scratch_operands = 0 : i64, tpu.core_type = #tpu.core_type<tc>, window_params = [{transform_indices = @transform_0, window_bounds = array<i64: 4, 128>}, {pipeline_mode = #tpu.pipeline_mode<synchronous>, transform_indices = @transform_1, window_bounds = array<i64: 128, 4>}, {pipeline_mode = #tpu.pipeline_mode<synchronous>, transform_indices = @transform_2, window_bounds = array<i64: 128, 1>}, {pipeline_mode = #tpu.pipeline_mode<synchronous>, transform_indices = @transform_3, window_bounds = array<i64: 8, 128>}, {pipeline_mode = #tpu.pipeline_mode<synchronous>, transform_indices = @transform_4, window_bounds = array<i64: 8, 1>}, {transform_indices = @transform_5, window_bounds = array<i64: 2, 128>}]} {
    %c0 = arith.constant 0 : index
    %c0_0 = arith.constant 0 : index
    %0 = vector.load %arg1[%c0, %c0_0] : memref<4x128xf32, #tpu.memory_space<vmem>>, vector<4x128xf32>
    %c0_1 = arith.constant 0 : index
    %c0_2 = arith.constant 0 : index
    %1 = vector.load %arg2[%c0_1, %c0_2] : memref<128x4xf32, #tpu.memory_space<vmem>>, vector<128x4xf32>
    %cst = arith.constant dense<0.000000e+00> : vector<128x128xf32>
    %2 = tpu.matmul %1, %0, %cst {dimension_numbers = #tpu.dot_dimension_numbers<[1], [0], [0], [1], [0, 0, 1, 1], [], []>} : vector<128x4xf32>, vector<4x128xf32>, vector<128x128xf32> -> vector<128x128xf32>
    %c0_3 = arith.constant 0 : index
    %c0_4 = arith.constant 0 : index
    %3 = vector.load %arg3[%c0_3, %c0_4] : memref<128x1xf32, #tpu.memory_space<vmem>>, vector<128x1xf32>
    %4 = vector.broadcast %3 : vector<128x1xf32> to vector<128x128xf32>
    %5 = arith.addf %2, %4 : vector<128x128xf32>
    %cst_5 = arith.constant 0.000000e+00 : f32
    %6 = vector.broadcast %cst_5 : f32 to vector<128x128xf32>
    %7 = arith.maximumf %5, %6 : vector<128x128xf32>
    %c0_6 = arith.constant 0 : index
    %c0_7 = arith.constant 0 : index
    %8 = vector.load %arg4[%c0_6, %c0_7] : memref<8x128xf32, #tpu.memory_space<vmem>>, vector<8x128xf32>
    %cst_8 = arith.constant dense<0.000000e+00> : vector<8x128xf32>
    %9 = tpu.matmul %8, %7, %cst_8 {dimension_numbers = #tpu.dot_dimension_numbers<[1], [0], [0], [1], [0, 0, 1, 1], [], []>} : vector<8x128xf32>, vector<128x128xf32>, vector<8x128xf32> -> vector<8x128xf32>
    %c0_9 = arith.constant 0 : index
    %c0_10 = arith.constant 0 : index
    %10 = vector.load %arg5[%c0_9, %c0_10] : memref<8x1xf32, #tpu.memory_space<vmem>>, vector<8x1xf32>
    %11 = vector.broadcast %10 : vector<8x1xf32> to vector<8x128xf32>
    %12 = arith.addf %9, %11 : vector<8x128xf32>
    %13 = vector.extract_strided_slice %12 {offsets = [1, 0], sizes = [1, 128], strides = [1, 1]} : vector<8x128xf32> to vector<1x128xf32>
    %14 = vector.extract_strided_slice %12 {offsets = [0, 0], sizes = [1, 128], strides = [1, 1]} : vector<8x128xf32> to vector<1x128xf32>
    %15 = arith.subf %13, %14 : vector<1x128xf32>
    %16 = arith.negf %15 : vector<1x128xf32>
    %17 = math.exp %16 : vector<1x128xf32>
    %cst_11 = arith.constant 1.000000e+00 : f32
    %18 = vector.broadcast %cst_11 : f32 to vector<1x128xf32>
    %19 = arith.addf %18, %17 : vector<1x128xf32>
    %20 = arith.divf %18, %19 : vector<1x128xf32>
    %cst_12 = arith.constant 1.000000e+00 : f32
    %21 = vector.broadcast %cst_12 : f32 to vector<1x128xf32>
    %22 = arith.subf %21, %20 : vector<1x128xf32>
    %23 = tpu.concatenate %22, %20 in 0 : vector<1x128xf32>, vector<1x128xf32> -> vector<2x128xf32>
    %c0_13 = arith.constant 0 : index
    %c0_14 = arith.constant 0 : index
    %24 = vector.load %arg6[%c0_13, %c0_14] : memref<2x128xf32, #tpu.memory_space<vmem>>, vector<2x128xf32>
    tpu.vector_store %arg6[%c0_13, %c0_14], %23 {strides = array<i32>} : memref<2x128xf32, #tpu.memory_space<vmem>>, vector<2x128xf32>,
    return
  }
  func.func @transform_0(%arg0: i32) -> (i32, i32) {
    %c0_i32 = arith.constant 0 : i32
    %c0_i32_0 = arith.constant 0 : i32
    return %c0_i32, %arg0 : i32, i32
  }
  func.func @transform_1(%arg0: i32) -> (i32, i32) {
    %c0_i32 = arith.constant 0 : i32
    %c0_i32_0 = arith.constant 0 : i32
    %c0_i32_1 = arith.constant 0 : i32
    return %c0_i32, %c0_i32_0 : i32, i32
  }
  func.func @transform_2(%arg0: i32) -> (i32, i32) {
    %c0_i32 = arith.constant 0 : i32
    %c0_i32_0 = arith.constant 0 : i32
    %c0_i32_1 = arith.constant 0 : i32
    return %c0_i32, %c0_i32_0 : i32, i32
  }
  func.func @transform_3(%arg0: i32) -> (i32, i32) {
    %c0_i32 = arith.constant 0 : i32
    %c0_i32_0 = arith.constant 0 : i32
    %c0_i32_1 = arith.constant 0 : i32
    return %c0_i32, %c0_i32_0 : i32, i32
  }
  func.func @transform_4(%arg0: i32) -> (i32, i32) {
    %c0_i32 = arith.constant 0 : i32
    %c0_i32_0 = arith.constant 0 : i32
    %c0_i32_1 = arith.constant 0 : i32
    return %c0_i32, %c0_i32_0 : i32, i32
  }
  func.func @transform_5(%arg0: i32) -> (i32, i32) {
    %c0_i32 = arith.constant 0 : i32
    %c0_i32_0 = arith.constant 0 : i32
    return %c0_i32, %arg0 : i32, i32
  }
}

</mosaic_0001>

<llo_original>
// kernel: policy_forward.1
$region0: #{policy_forward.1}
  #allocation0 [shape = 'u32[]', space=smem, size = 0x4, offset = 0x4, fixed_abs, tag = 'smem constant byte address 0x4 - core index']
  #allocation1 [shape = 'u32[144,128]{1,0:T(1,128)}', space=vmem, size = 0x12000, scoped, tag = 'internal scratch']
  %s0 = inlined_call_operand.vmem [shape: f32[4,128], index: 0, kind: input, shape index: {}]
  %s1 = inlined_call_operand.vmem [shape: f32[128,4], index: 1, kind: input, shape index: {}]
  %s2 = inlined_call_operand.vmem [shape: f32[128,1], index: 2, kind: input, shape index: {}]
  %s3 = inlined_call_operand.vmem [shape: f32[8,128], index: 3, kind: input, shape index: {}]
  %s4 = inlined_call_operand.vmem [shape: f32[8,1], index: 4, kind: input, shape index: {}]
  %s5 = inlined_call_operand.hbm [shape: f32[2,128], index: 5, kind: output, shape index: {}]
  %s6 = sld [smem:[#allocation0]]
  $region30: #{policy_forward.1} parent=0
    _
  %s8 = ssub.s32 1, %s6
  %s9 = scalar_select 0, %s8, %s6
  $region1: #{policy_forward.1} parent=0
    #allocation2 [shape = 'u8[1024]{0}', space=vmem, size = 0x400, scoped, tag = 'output window, operand 0, single buffered']
    #allocation3 [shape = 's32[1]{0}', space=sflag, size = 0x4, scoped, tag = 'scoped memory for policy_forward.1']
    %10 = vsyncpa [#allocation3], 0
    // Predicated region
    $region2: #{policy_forward.1} parent=1 // pred_check
      _
    $region3: #{policy_forward.1} parent=1 // pred_check_branch
      %12 = sbr.rel (0) target = $region5
    $region4: #{policy_forward.1} parent=1 // pred_region
      _
    $region5: #{policy_forward.1} parent=1 // pred_fallthru
      _
    // Predicated region
    $region6: #{policy_forward.1} parent=1 // pred_check
      _
    $region7: #{policy_forward.1} parent=1 // pred_check_branch
      %14 = sbr.rel (0) target = $region9
    $region8: #{policy_forward.1} parent=1 // pred_region
      _
    $region9: #{policy_forward.1} parent=1 // pred_fallthru
      _
    // Predicated region
    $region10: #{policy_forward.1} parent=1 // pred_check
      _
    $region11: #{policy_forward.1} parent=1 // pred_check_branch
      %16 = sbr.rel (0) target = $region13
    $region12: #{policy_forward.1} parent=1 // pred_region
      _
    $region13: #{policy_forward.1} parent=1 // pred_fallthru
      _
    // Predicated region
    $region14: #{policy_forward.1} parent=1 // pred_check
      _
    $region15: #{policy_forward.1} parent=1 // pred_check_branch
      %18 = sbr.rel (0) target = $region17
    $region16: #{policy_forward.1} parent=1 // pred_region
      _
    $region17: #{policy_forward.1} parent=1 // pred_fallthru
      _
    // Predicated region
    $region18: #{policy_forward.1} parent=1 // pred_check
      _
    $region19: #{policy_forward.1} parent=1 // pred_check_branch
      %20 = sbr.rel (0) target = $region21
    $region20: #{policy_forward.1} parent=1 // pred_region
      _
    $region21: #{policy_forward.1} parent=1 // pred_fallthru
      _
    %v21 = vld [vmem:[%s0] sm:$0xf]
    %v22 = vld [vmem:[%s1] sm:$0xff]
    %v23 = vld [vmem:[%s1 + $0x8] sm:$0xff]
    %v24 = vld [vmem:[%s1 + $0x10] sm:$0xff]
    %v25 = vld [vmem:[%s1 + $0x18] sm:$0xff]
    %v26 = vld [vmem:[%s1 + $0x20] sm:$0xff]
    %v27 = vld [vmem:[%s1 + $0x28] sm:$0xff]
    %v28 = vld [vmem:[%s1 + $0x30] sm:$0xff]
    %v29 = vld [vmem:[%s1 + $0x38] sm:$0xff]
    %v30 = vld [vmem:[%s1 + $0x40] sm:$0xff]
    %v31 = vld [vmem:[%s1 + $0x48] sm:$0xff]
    %v32 = vld [vmem:[%s1 + $0x50] sm:$0xff]
    %v33 = vld [vmem:[%s1 + $0x58] sm:$0xff]
    %v34 = vld [vmem:[%s1 + $0x60] sm:$0xff]
    %v35 = vld [vmem:[%s1 + $0x68] sm:$0xff]
    %v36 = vld [vmem:[%s1 + $0x70] sm:$0xff]
    %v37 = vld [vmem:[%s1 + $0x78] sm:$0xff]
    %v38 = vld [vmem:[%s2] sm:$0xff]
    %v39 = vld [vmem:[%s2 + $0x8] sm:$0xff]
    %v40 = vld [vmem:[%s2 + $0x10] sm:$0xff]
    %v41 = vld [vmem:[%s2 + $0x18] sm:$0xff]
    %v42 = vld [vmem:[%s2 + $0x20] sm:$0xff]
    %v43 = vld [vmem:[%s2 + $0x28] sm:$0xff]
    %v44 = vld [vmem:[%s2 + $0x30] sm:$0xff]
    %v45 = vld [vmem:[%s2 + $0x38] sm:$0xff]
    %v46 = vld [vmem:[%s2 + $0x40] sm:$0xff]
    %v47 = vld [vmem:[%s2 + $0x48] sm:$0xff]
    %v48 = vld [vmem:[%s2 + $0x50] sm:$0xff]
    %v49 = vld [vmem:[%s2 + $0x58] sm:$0xff]
    %v50 = vld [vmem:[%s2 + $0x60] sm:$0xff]
    %v51 = vld [vmem:[%s2 + $0x68] sm:$0xff]
    %v52 = vld [vmem:[%s2 + $0x70] sm:$0xff]
    %v53 = vld [vmem:[%s2 + $0x78] sm:$0xff]
    %55 = vset.pattern.permute.xlu0 0
    %56 = vperm.xlu0 %55, %v38
    %v57 = vpop.permute.xlu0 %56
    %60 = vset.pattern.permute.xlu0 0
    %61 = vperm.xlu0 %60, %v39
    %v62 = vpop.permute.xlu0 %61
    %65 = vset.pattern.permute.xlu0 0
    %66 = vperm.xlu0 %65, %v40
    %v67 = vpop.permute.xlu0 %66
    %70 = vset.pattern.permute.xlu0 0
    %71 = vperm.xlu0 %70, %v41
    %v72 = vpop.permute.xlu0 %71
    %75 = vset.pattern.permute.xlu0 0
    %76 = vperm.xlu0 %75, %v42
    %v77 = vpop.permute.xlu0 %76
    %80 = vset.pattern.permute.xlu0 0
    %81 = vperm.xlu0 %80, %v43
    %v82 = vpop.permute.xlu0 %81
    %85 = vset.pattern.permute.xlu0 0
    %86 = vperm.xlu0 %85, %v44
    %v87 = vpop.permute.xlu0 %86
    %90 = vset.pattern.permute.xlu0 0
    %91 = vperm.xlu0 %90, %v45
    %v92 = vpop.permute.xlu0 %91
    %95 = vset.pattern.permute.xlu0 0
    %96 = vperm.xlu0 %95, %v46
    %v97 = vpop.permute.xlu0 %96
    %100 = vset.pattern.permute.xlu0 0
    %101 = vperm.xlu0 %100, %v47
    %v102 = vpop.permute.xlu0 %101
    %105 = vset.pattern.permute.xlu0 0
    %106 = vperm.xlu0 %105, %v48
    %v107 = vpop.permute.xlu0 %106
    %110 = vset.pattern.permute.xlu0 0
    %111 = vperm.xlu0 %110, %v49
    %v112 = vpop.permute.xlu0 %111
    %115 = vset.pattern.permute.xlu0 0
    %116 = vperm.xlu0 %115, %v50
    %v117 = vpop.permute.xlu0 %116
    %120 = vset.pattern.permute.xlu0 0
    %121 = vperm.xlu0 %120, %v51
    %v122 = vpop.permute.xlu0 %121
    %125 = vset.pattern.permute.xlu0 0
    %126 = vperm.xlu0 %125, %v52
    %v127 = vpop.permute.xlu0 %126
    %130 = vset.pattern.permute.xlu0 0
    %131 = vperm.xlu0 %130, %v53
    %v132 = vpop.permute.xlu0 %131
    %vm134 = vcmask 31744
    %v136 = vsel %vm134, %v22, 0
    %v139 = vsel %vm134, %v23, 0
    %v142 = vsel %vm134, %v24, 0
    %v145 = vsel %vm134, %v25, 0
    %v148 = vsel %vm134, %v26, 0
    %v151 = vsel %vm134, %v27, 0
    %v154 = vsel %vm134, %v28, 0
    %v157 = vsel %vm134, %v29, 0
    %v160 = vsel %vm134, %v30, 0
    %v163 = vsel %vm134, %v31, 0
    %v166 = vsel %vm134, %v32, 0
    %v169 = vsel %vm134, %v33, 0
    %v172 = vsel %vm134, %v34, 0
    %v175 = vsel %vm134, %v35, 0
    %v178 = vsel %vm134, %v36, 0
    %v181 = vsel %vm134, %v37, 0
    %vm183 = vcmask 1043456
    %v185 = vsel %vm183, %v21, 0
    %187 = vmatprep.subr.mxu0 0.0
    %188 = vmatpush1.msra.mxu0 %v185
    %189 = vmatprep.subr.mxu0 0.0
    %190 = vmatpush1.msra.mxu0 0.0
    %191 = vmatprep.subr.mxu0 0.0
    %192 = vmatpush1.msra.mxu0 0.0
    %193 = vmatprep.subr.mxu0 0.0
    %194 = vmatpush1.msra.mxu0 0.0
    %195 = vmatprep.subr.mxu0 0.0
    %196 = vmatpush1.msra.mxu0 0.0
    %197 = vmatprep.subr.mxu0 0.0
    %198 = vmatpush1.msra.mxu0 0.0
    %199 = vmatprep.subr.mxu0 0.0
    %200 = vmatpush1.msra.mxu0 0.0
    %201 = vmatprep.subr.mxu0 0.0
    %202 = vmatpush1.msra.mxu0 0.0
    %203 = vmatprep.subr.mxu0 0.0
    %204 = vmatpush1.msra.mxu0 0.0
    %205 = vmatprep.subr.mxu0 0.0
    %206 = vmatpush1.msra.mxu0 0.0
    %207 = vmatprep.subr.mxu0 0.0
    %208 = vmatpush1.msra.mxu0 0.0
    %209 = vmatprep.subr.mxu0 0.0
    %210 = vmatpush1.msra.mxu0 0.0
    %211 = vmatprep.subr.mxu0 0.0
    %212 = vmatpush1.msra.mxu0 0.0
    %213 = vmatprep.subr.mxu0 0.0
    %214 = vmatpush1.msra.mxu0 0.0
    %215 = vmatprep.subr.mxu0 0.0
    %216 = vmatpush1.msra.mxu0 0.0
    %217 = vmatprep.subr.mxu0 0.0
    %218 = vmatpush1.msra.mxu0 0.0
    %219 = vmatprep.subr.mxu0 0.0
    %220 = vmatpush1.msra.mxu0 0.0
    %221 = vmatprep.subr.mxu0 0.0
    %222 = vmatpush1.msra.mxu0 0.0
    %223 = vmatprep.subr.mxu0 0.0
    %224 = vmatpush1.msra.mxu0 0.0
    %225 = vmatprep.subr.mxu0 0.0
    %226 = vmatpush1.msra.mxu0 0.0
    %227 = vmatprep.subr.mxu0 0.0
    %228 = vmatpush1.msra.mxu0 0.0
    %229 = vmatprep.subr.mxu0 0.0
    %230 = vmatpush1.msra.mxu0 0.0
    %231 = vmatprep.subr.mxu0 0.0
    %232 = vmatpush1.msra.mxu0 0.0
    %233 = vmatprep.subr.mxu0 0.0
    %234 = vmatpush1.msra.mxu0 0.0
    %235 = vmatprep.subr.mxu0 0.0
    %236 = vmatpush1.msra.mxu0 0.0
    %237 = vmatprep.subr.mxu0 0.0
    %238 = vmatpush1.msra.mxu0 0.0
    %239 = vmatprep.subr.mxu0 0.0
    %240 = vmatpush1.msra.mxu0 0.0
    %241 = vmatprep.subr.mxu0 0.0
    %242 = vmatpush1.msra.mxu0 0.0
    %243 = vmatprep.subr.mxu0 0.0
    %244 = vmatpush1.msra.mxu0 0.0
    %245 = vmatprep.subr.mxu0 0.0
    %246 = vmatpush1.msra.mxu0 0.0
    %247 = vmatprep.subr.mxu0 0.0
    %248 = vmatpush1.msra.mxu0 0.0
    %249 = vmatprep.subr.mxu0 0.0
    %250 = vmatpush1.msra.mxu0 0.0
    %251 = vmatprep.mubr.f32.mxu0 0.0
    %252 = vmatmul.mubr.f32.gmra.mrb[0].mxu0 %v136
    %v253 = vpop.f32.mrb[0].mxu0
    %v254 = vadd.f32 %v57, %v253
    %v255 = vpop.f32.mrb[0].mxu0
    %256 = vmatprep.mubr.f32.mxu0 0.0
    %257 = vmatmul.mubr.f32.gmra.mrb[0].mxu0 %v139
    %v258 = vpop.f32.mrb[0].mxu0
    %v259 = vadd.f32 %v62, %v258
    %v260 = vpop.f32.mrb[0].mxu0
    %261 = vmatprep.mubr.f32.mxu0 0.0
    %262 = vmatmul.mubr.f32.gmra.mrb[0].mxu0 %v142
    %v263 = vpop.f32.mrb[0].mxu0
    %v264 = vadd.f32 %v67, %v263
    %v265 = vpop.f32.mrb[0].mxu0
    %266 = vmatprep.mubr.f32.mxu0 0.0
    %267 = vmatmul.mubr.f32.gmra.mrb[0].mxu0 %v145
    %v268 = vpop.f32.mrb[0].mxu0
    %v269 = vadd.f32 %v72, %v268
    %v270 = vpop.f32.mrb[0].mxu0
    %271 = vmatprep.mubr.f32.mxu0 0.0
    %272 = vmatmul.mubr.f32.gmra.mrb[0].mxu0 %v148
    %v273 = vpop.f32.mrb[0].mxu0
    %v274 = vadd.f32 %v77, %v273
    %v275 = vpop.f32.mrb[0].mxu0
    %276 = vmatprep.mubr.f32.mxu0 0.0
    %277 = vmatmul.mubr.f32.gmra.mrb[0].mxu0 %v151
    %v278 = vpop.f32.mrb[0].mxu0
    %v279 = vadd.f32 %v82, %v278
    %v280 = vpop.f32.mrb[0].mxu0
    %281 = vmatprep.mubr.f32.mxu0 0.0
    %282 = vmatmul.mubr.f32.gmra.mrb[0].mxu0 %v154
    %v283 = vpop.f32.mrb[0].mxu0
    %v284 = vadd.f32 %v87, %v283
    %v285 = vpop.f32.mrb[0].mxu0
    %286 = vmatprep.mubr.f32.mxu0 0.0
    %287 = vmatmul.mubr.f32.gmra.mrb[0].mxu0 %v157
    %v288 = vpop.f32.mrb[0].mxu0
    %v289 = vadd.f32 %v92, %v288
    %v290 = vpop.f32.mrb[0].mxu0
    %291 = vmatprep.mubr.f32.mxu0 0.0
    %292 = vmatmul.mubr.f32.gmra.mrb[0].mxu0 %v160
    %v293 = vpop.f32.mrb[0].mxu0
    %v294 = vadd.f32 %v97, %v293
    %v295 = vpop.f32.mrb[0].mxu0
    %296 = vmatprep.mubr.f32.mxu0 0.0
    %297 = vmatmul.mubr.f32.gmra.mrb[0].mxu0 %v163
    %v298 = vpop.f32.mrb[0].mxu0
    %v299 = vadd.f32 %v102, %v298
    %v300 = vpop.f32.mrb[0].mxu0
    %301 = vmatprep.mubr.f32.mxu0 0.0
    %302 = vmatmul.mubr.f32.gmra.mrb[0].mxu0 %v166
    %v303 = vpop.f32.mrb[0].mxu0
    %v304 = vadd.f32 %v107, %v303
    %v305 = vpop.f32.mrb[0].mxu0
    %306 = vmatprep.mubr.f32.mxu0 0.0
    %307 = vmatmul.mubr.f32.gmra.mrb[0].mxu0 %v169
    %v308 = vpop.f32.mrb[0].mxu0
    %v309 = vadd.f32 %v112, %v308
    %v310 = vpop.f32.mrb[0].mxu0
    %311 = vmatprep.mubr.f32.mxu0 0.0
    %312 = vmatmul.mubr.f32.gmra.mrb[0].mxu0 %v172
    %v313 = vpop.f32.mrb[0].mxu0
    %v314 = vadd.f32 %v117, %v313
    %v315 = vpop.f32.mrb[0].mxu0
    %316 = vmatprep.mubr.f32.mxu0 0.0
    %317 = vmatmul.mubr.f32.gmra.mrb[0].mxu0 %v175
    %v318 = vpop.f32.mrb[0].mxu0
    %v319 = vadd.f32 %v122, %v318
    %v320 = vpop.f32.mrb[0].mxu0
    %321 = vmatprep.mubr.f32.mxu0 0.0
    %322 = vmatmul.mubr.f32.gmra.mrb[0].mxu0 %v178
    %v323 = vpop.f32.mrb[0].mxu0
    %v324 = vadd.f32 %v127, %v323
    %v325 = vpop.f32.mrb[0].mxu0
    %326 = vmatprep.mubr.f32.mxu0 0.0
    %327 = vmatmul.mubr.f32.gmra.mrb[0].mxu0 %v181
    %v328 = vpop.f32.mrb[0].mxu0
    %v329 = vadd.f32 %v132, %v328
    %v330 = vpop.f32.mrb[0].mxu0
    %331 = vdwg.mxu0
    %v332 = vmax.f32 %v254, 0.0
    %v333 = vmax.f32 %v259, 0.0
    %v334 = vmax.f32 %v264, 0.0
    %v335 = vmax.f32 %v269, 0.0
    %v336 = vmax.f32 %v274, 0.0
    %v337 = vmax.f32 %v279, 0.0
    %v338 = vmax.f32 %v284, 0.0
    %v339 = vmax.f32 %v289, 0.0
    %v340 = vmax.f32 %v294, 0.0
    %v341 = vmax.f32 %v299, 0.0
    %v342 = vmax.f32 %v304, 0.0
    %v343 = vmax.f32 %v309, 0.0
    %v344 = vmax.f32 %v314, 0.0
    %v345 = vmax.f32 %v319, 0.0
    %v346 = vmax.f32 %v324, 0.0
    %v347 = vmax.f32 %v329, 0.0
    %v348 = vld [vmem:[%s3] sm:$0xff]
    %v349 = vld [vmem:[%s4] sm:$0xff]
    %351 = vset.pattern.permute.xlu0 0
    %352 = vperm.xlu0 %351, %v349
    %v353 = vpop.permute.xlu0 %352
    %355 = vmatprep.subr.mxu0 0.0
    %356 = vmatpush1.msra.mxu0 %v332
    %357 = vmatprep.subr.mxu0 0.0
    %358 = vmatpush1.msra.mxu0 %v333
    %359 = vmatprep.subr.mxu0 0.0
    %360 = vmatpush1.msra.mxu0 %v334
    %361 = vmatprep.subr.mxu0 0.0
    %362 = vmatpush1.msra.mxu0 %v335
    %363 = vmatprep.subr.mxu0 0.0
    %364 = vmatpush1.msra.mxu0 %v336
    %365 = vmatprep.subr.mxu0 0.0
    %366 = vmatpush1.msra.mxu0 %v337
    %367 = vmatprep.subr.mxu0 0.0
    %368 = vmatpush1.msra.mxu0 %v338
    %369 = vmatprep.subr.mxu0 0.0
    %370 = vmatpush1.msra.mxu0 %v339
    %371 = vmatprep.subr.mxu0 0.0
    %372 = vmatpush1.msra.mxu0 %v340
    %373 = vmatprep.subr.mxu0 0.0
    %374 = vmatpush1.msra.mxu0 %v341
    %375 = vmatprep.subr.mxu0 0.0
    %376 = vmatpush1.msra.mxu0 %v342
    %377 = vmatprep.subr.mxu0 0.0
    %378 = vmatpush1.msra.mxu0 %v343
    %379 = vmatprep.subr.mxu0 0.0
    %380 = vmatpush1.msra.mxu0 %v344
    %381 = vmatprep.subr.mxu0 0.0
    %382 = vmatpush1.msra.mxu0 %v345
    %383 = vmatprep.subr.mxu0 0.0
    %384 = vmatpush1.msra.mxu0 %v346
    %385 = vmatprep.subr.mxu0 0.0
    %386 = vmatpush1.msra.mxu0 %v347
    %387 = vmatprep.subr.mxu0 0.0
    %388 = vmatpush1.msra.mxu0 0.0
    %389 = vmatprep.subr.mxu0 0.0
    %390 = vmatpush1.msra.mxu0 0.0
    %391 = vmatprep.subr.mxu0 0.0
    %392 = vmatpush1.msra.mxu0 0.0
    %393 = vmatprep.subr.mxu0 0.0
    %394 = vmatpush1.msra.mxu0 0.0
    %395 = vmatprep.subr.mxu0 0.0
    %396 = vmatpush1.msra.mxu0 0.0
    %397 = vmatprep.subr.mxu0 0.0
    %398 = vmatpush1.msra.mxu0 0.0
    %399 = vmatprep.subr.mxu0 0.0
    %400 = vmatpush1.msra.mxu0 0.0
    %401 = vmatprep.subr.mxu0 0.0
    %402 = vmatpush1.msra.mxu0 0.0
    %403 = vmatprep.subr.mxu0 0.0
    %404 = vmatpush1.msra.mxu0 0.0
    %405 = vmatprep.subr.mxu0 0.0
    %406 = vmatpush1.msra.mxu0 0.0
    %407 = vmatprep.subr.mxu0 0.0
    %408 = vmatpush1.msra.mxu0 0.0
    %409 = vmatprep.subr.mxu0 0.0
    %410 = vmatpush1.msra.mxu0 0.0
    %411 = vmatprep.subr.mxu0 0.0
    %412 = vmatpush1.msra.mxu0 0.0
    %413 = vmatprep.subr.mxu0 0.0
    %414 = vmatpush1.msra.mxu0 0.0
    %415 = vmatprep.subr.mxu0 0.0
    %416 = vmatpush1.msra.mxu0 0.0
    %417 = vmatprep.subr.mxu0 0.0
    %418 = vmatpush1.msra.mxu0 0.0
    %419 = vmatprep.mubr.f32.mxu0 0.0
    %420 = vmatmul.mubr.f32.gmra.mrb[0].mxu0 %v348
    %v421 = vpop.f32.mrb[0].mxu0
    %v422 = vadd.f32 %v353, %v421
    %v423 = vpop.f32.mrb[0].mxu0
    %424 = vdwg.mxu0
    %v426 = vrot.slane %v422, 7
    %v428 = vsub.f32 %v422, %v426
    %v429 = vxor.u32 %v428, 2147483648
    %v430 = vmul.f32 %v429, 1.442695
    %v431 = vpow.pop %v430
    %v432 = vadd.f32 %v431, 1.0
    %v433 = vrcp.pop %v432
    %v434 = vmul.f32 1.0, %v433
    %v435 = vsub.f32 1.0, %v434
    %v437 = vrot.slane %v435, 1
    %vm439 = vcmask 1040384
    %v440 = vsel %vm439, %v437, %v434
    %441 = vst [vmem:[#allocation2] sm:$0x3] %v440
    // Predicated region
    $region22: #{policy_forward.1} parent=1 // pred_check
      _
    $region23: #{policy_forward.1} parent=1 // pred_check_branch
      %443 = sbr.rel (0) target = $region25
    $region24: #{policy_forward.1} parent=1 // pred_region
      %s445 = ssub.s32 32, 32
      %446 = vsyncadd [#allocation3], %s445
      %s448 = sshll.u32 [#allocation2], 4
      %s449 = int_to_ptr.vmem [resolvable:$true] %s448
      %451 = dma.vmem_to_hbm [thread:$0]  %s449, 32, %s5, [#allocation3]
    $region25: #{policy_forward.1} parent=1 // pred_fallthru
      _
    // Predicated region
    $region26: #{policy_forward.1} parent=1 // pred_check
      _
    $region27: #{policy_forward.1} parent=1 // pred_check_branch
      %453 = sbr.rel (0) target = $region29
    $region28: #{policy_forward.1} parent=1 // pred_region
      %454 = dma.done [#allocation3], 32
    $region29: #{policy_forward.1} parent=1 // pred_fallthru
      _
    %455 = vsyncpa [#allocation3], 1

</llo_original>
